<compile_context>
chip_gen: v7x
topology: tpu7x:2x2x1
jax: 0.10.0
libtpu: 0.0.40
codegen_flags: <defaults>
</compile_context>

<pallas_src>
import functools

import jax
import jax.numpy as jnp
from jax.experimental import pallas as pl
from jax.experimental.pallas import tpu as pltpu

LANES = 128


def _round_up(x, m):
    return ((x + m - 1) // m) * m


def _chip_flags():
    """Best-effort TPU generation detection (safe defaults if unknown)."""
    try:
        kind = jax.devices()[0].device_kind.lower()
    except Exception:
        kind = ""
    is_v7 = ("v7" in kind) or ("7x" in kind)
    is_v5e = ("v5 lite" in kind) or ("v5e" in kind) or ("v5litepod" in kind)
    return is_v7, is_v5e


def _focal_kernel(*refs, gamma, alpha, rows, row_tile, tiles_per_core,
                  n_full_tiles, has_weight, needs_mask, use_sigmoid,
                  approx_recip):
    if has_weight:
        pred_ref, tgt_ref, w_ref, out_ref = refs
    else:
        pred_ref, tgt_ref, out_ref = refs
        w_ref = None

    c = pl.program_id(0)
    i = pl.program_id(1)

    # Output block (8,128) is resident across the "arbitrary" i axis per core:
    # init on first step, accumulate, auto-writeback when c changes / grid ends.
    @pl.when(i == 0)
    def _():
        out_ref[...] = jnp.zeros_like(out_ref)

    x = pred_ref[...].astype(jnp.float32)
    t = tgt_ref[...].astype(jnp.float32)

    # Single shared transcendental: e = exp(-|x|) serves both the sigmoid and
    # the numerically-stable BCE-with-logits term log1p(exp(-|x|)).
    e = jnp.exp(-jnp.abs(x))
    if use_sigmoid:
        d = 1.0 + e
        if approx_recip:
            # v7x: EUP vrcp + one Newton step (restores ~f32 precision).
            inv = pl.reciprocal(d, approx=True)
            inv = inv * (2.0 - d * inv)
        else:
            inv = 1.0 / d
        s = jnp.where(x >= 0.0, inv, e * inv)       # sigmoid(x), stable both sides
    else:
        s = x                                        # pred already probabilities

    pt = (1.0 - s) * t + s * (1.0 - t)

    # pt ** gamma: integer-gamma fast path (default gamma=2 -> pt*pt) avoids
    # the generic pow -> exp(gamma*log(pt)) on the single-slot EUP.
    g = float(gamma)
    if g == int(g) and 0 <= int(g) <= 8:
        n = int(g)
        if n == 0:
            ptg = jnp.ones_like(pt)
        else:
            ptg = pt
            for _ in range(n - 1):
                ptg = ptg * pt
    else:
        ptg = pt ** g

    fw = (alpha * t + (1.0 - alpha) * (1.0 - t)) * ptg

    # Numerically stable BCE-with-logits (reduction='none'):
    #   max(x, 0) - x*t + log1p(exp(-|x|))
    bce = jnp.maximum(x, 0.0) - x * t + jnp.log1p(e)

    loss = bce * fw
    if has_weight:
        loss = loss * w_ref[...].astype(jnp.float32)

    def _accum(val):
        # Vreg-shaped steady-state reduction: leading-axis sum is pure VPU
        # adds; no per-step cross-lane XLU reduce.
        out_ref[...] += val.reshape(row_tile // 8, 8, LANES).sum(axis=0)

    if needs_mask:
        tile_idx = c * tiles_per_core + i

        # Full tiles: zero mask cost.
        @pl.when(tile_idx < n_full_tiles)
        def _():
            _accum(loss)

        # Ragged last tile / phantom tiles: row-granular mask (select so any
        # garbage NaN/Inf never reaches the accumulator).
        @pl.when(tile_idx >= n_full_tiles)
        def _():
            valid_rows = rows - tile_idx * row_tile   # <= 0 for phantom tiles
            row_iota = jax.lax.broadcasted_iota(jnp.int32, (row_tile, LANES), 0)
            _accum(jnp.where(row_iota < valid_rows, loss, 0.0))
    else:
        _accum(loss)


def _jax_loss_sum(x, t, w, gamma, alpha, use_sigmoid):
    """Pure-JAX loss sum (used for the <128-element tail / tiny inputs)."""
    x = x.astype(jnp.float32)
    t = t.astype(jnp.float32)
    s = jax.nn.sigmoid(x) if use_sigmoid else x
    pt = (1.0 - s) * t + s * (1.0 - t)
    fw = (alpha * t + (1.0 - alpha) * (1.0 - t)) * pt ** gamma
    if w is not None:
        fw = fw * w.astype(jnp.float32)
    bce = jnp.maximum(x, 0.0) - x * t + jnp.log1p(jnp.exp(-jnp.abs(x)))
    return jnp.sum(bce * fw)


def bce_focal_loss(pred, target, weight=None, *, gamma=2.0, alpha=0.25,
                   reduction='mean', use_sigmoid=True):
    """Pallas TPU implementation of BCEFocalLoss.forward ('mean'/'sum')."""
    if reduction not in ("mean", "sum"):
        # TODO(synk): reduction='none' (full-size elementwise output) not implemented.
        raise NotImplementedError("only 'mean' / 'sum' reductions supported")

    pred = jnp.asarray(pred)
    target = jnp.asarray(target)
    if target.dtype != pred.dtype:            # mirrors torch target.type_as(pred)
        target = target.astype(pred.dtype)
    has_weight = weight is not None
    weight = jnp.asarray(weight) if has_weight else None

    total = int(pred.size)
    rem = total % LANES
    total_trunc = total - rem
    rows = total_trunc // LANES

    # Generation-aware config.
    is_v7, is_v5e = _chip_flags()
    num_cores = 2 if is_v7 else 1             # megacore split only helps on v7x
    row_cap = 2048 if is_v5e else 4096        # bytes/step vs scoped-VMEM default

    if rows == 0:
        # Fewer than 128 elements: not worth a kernel launch.
        result = _jax_loss_sum(pred.reshape(-1), target.reshape(-1),
                               weight.reshape(-1) if has_weight else None,
                               gamma, alpha, use_sigmoid)
        return result / float(total) if reduction == "mean" else result

    row_tile = min(row_cap, _round_up(rows, 8))
    n_tiles = pl.cdiv(rows, row_tile)
    tiles_per_core = pl.cdiv(n_tiles, num_cores)
    n_full_tiles = rows // row_tile
    # Mask only needed for a ragged last tile or phantom tiles from the split.
    needs_mask = (num_cores * tiles_per_core * row_tile != rows)

    def _to_2d(a):
        # Lane-dense view of the first total_trunc elements; no full-array pad.
        flat = a.reshape(-1)
        if rem:
            flat = flat[:total_trunc]
        return flat.reshape(rows, LANES)

    inputs = [_to_2d(pred), _to_2d(target)]
    if has_weight:
        inputs.append(_to_2d(weight))

    if num_cores * tiles_per_core > n_tiles:
        # Clamp phantom tiles onto a valid block; masked to zero in-kernel.
        def in_map(c, i):
            return (jnp.minimum(c * tiles_per_core + i, n_tiles - 1), 0)
    else:
        def in_map(c, i):
            return (c * tiles_per_core + i, 0)

    in_spec = pl.BlockSpec((row_tile, LANES), in_map)

    kernel = functools.partial(
        _focal_kernel, gamma=float(gamma), alpha=float(alpha),
        rows=int(rows), row_tile=int(row_tile),
        tiles_per_core=int(tiles_per_core), n_full_tiles=int(n_full_tiles),
        has_weight=has_weight, needs_mask=bool(needs_mask),
        use_sigmoid=bool(use_sigmoid), approx_recip=bool(is_v7))

    partials = pl.pallas_call(
        kernel,
        out_shape=jax.ShapeDtypeStruct((num_cores * 8, LANES), jnp.float32),
        grid_spec=pltpu.PrefetchScalarGridSpec(
            num_scalar_prefetch=0,
            grid=(num_cores, tiles_per_core),
            in_specs=[in_spec] * len(inputs),
            out_specs=pl.BlockSpec((8, LANES), lambda c, i: (c, 0)),
        ),
        compiler_params=pltpu.CompilerParams(
            dimension_semantics=("parallel", "arbitrary"),
            vmem_limit_bytes=32 * 1024 * 1024),
    )(*inputs)

    # Cross-lane/sublane reduce happens once here on a tiny (num_cores*8, 128)
    # array; keeping it in JAX avoids an SMEM-output path in the kernel.
    result = jnp.sum(partials)

    if rem:
        # <=127-element tail folded in with a tiny pure-JAX expression.
        tail_w = weight.reshape(-1)[total_trunc:] if has_weight else None
        result = result + _jax_loss_sum(pred.reshape(-1)[total_trunc:],
                                        target.reshape(-1)[total_trunc:],
                                        tail_w, gamma, alpha, use_sigmoid)

    if reduction == "mean":
        result = result / float(total)
    return result


def _reference(pred, target, weight=None, gamma=2.0, alpha=0.25,
               reduction='mean'):
    pred = jnp.asarray(pred, jnp.float32)
    target = jnp.asarray(target, jnp.float32)
    p = jax.nn.sigmoid(pred)
    pt = (1 - p) * target + p * (1 - target)
    fw = (alpha * target + (1 - alpha) * (1 - target)) * pt ** gamma
    if weight is not None:
        fw = fw * weight
    bce = jnp.maximum(pred, 0) - pred * target + jnp.log1p(jnp.exp(-jnp.abs(pred)))
    loss = bce * fw
    if reduction == 'mean':
        return jnp.mean(loss)
    return jnp.sum(loss)


if __name__ == "__main__":
    key = jax.random.PRNGKey(0)
    k1, k2, k3, k4, k5 = jax.random.split(key, 5)

    # Small shapes consistent with a dense prediction head: NCHW logits.
    shape = (2, 4, 16, 16)
    pred = jax.random.normal(k1, shape, dtype=jnp.float32) * 2.0
    target = (jax.random.uniform(k2, shape) > 0.7).astype(jnp.float32)

    loss = bce_focal_loss(pred, target, gamma=2.0, alpha=0.25, reduction='mean')
    loss = jax.block_until_ready(loss)
    ref = _reference(pred, target)
    assert jnp.allclose(loss, ref, rtol=1e-5, atol=1e-6), (loss, ref)

    # Weighted + sum-reduction path.
    weight = jax.random.uniform(k3, shape, dtype=jnp.float32)
    loss_w = bce_focal_loss(pred, target, weight, gamma=2.0, alpha=0.25,
                            reduction='sum')
    loss_w = jax.block_until_ready(loss_w)
    ref_w = _reference(pred, target, weight, reduction='sum')
    assert jnp.allclose(loss_w, ref_w, rtol=1e-5, atol=1e-5), (loss_w, ref_w)

    # Non-multiple-of-128 shape: exercises the ragged/masked tile and the
    # pure-JAX tail path (no full-array pad).
    shape_r = (3, 5, 7, 11)
    pred_r = jax.random.normal(k4, shape_r, dtype=jnp.float32) * 2.0
    target_r = (jax.random.uniform(k5, shape_r) > 0.5).astype(jnp.float32)
    loss_r = bce_focal_loss(pred_r, target_r, gamma=2.0, alpha=0.25,
                            reduction='mean')
    loss_r = jax.block_until_ready(loss_r)
    ref_r = _reference(pred_r, target_r)
    assert jnp.allclose(loss_r, ref_r, rtol=1e-5, atol=1e-6), (loss_r, ref_r)

    print("KERNEL_OK")
</pallas_src>

<mosaic_0001>
module attributes {stable_mosaic.version = 11 : i64} {
  func.func @_focal_kernel(%arg0: i32, %arg1: i32, %arg2: memref<16x128xf32, #tpu.memory_space<vmem>>, %arg3: memref<16x128xf32, #tpu.memory_space<vmem>>, %arg4: memref<8x128xf32, #tpu.memory_space<vmem>>) attributes {dimension_semantics = [#tpu.dimension_semantics<parallel>, #tpu.dimension_semantics<arbitrary>], iteration_bounds = array<i64: 1, 1>, scalar_prefetch = 0 : i64, scratch_operands = 0 : i64, tpu.core_type = #tpu.core_type<tc>, window_params = [{transform_indices = @transform_0, window_bounds = array<i64: 16, 128>}, {transform_indices = @transform_1, window_bounds = array<i64: 16, 128>}, {transform_indices = @transform_2, window_bounds = array<i64: 8, 128>}]} {
    %c0_i32 = arith.constant 0 : i32
    %0 = arith.cmpi eq, %arg1, %c0_i32 : i32
    %1 = arith.extui %0 : i1 to i32
    %c0_i32_0 = arith.constant 0 : i32
    %2 = arith.cmpi ne, %1, %c0_i32_0 : i32
    scf.if %2 {
      %cst_18 = arith.constant 0.000000e+00 : f32
      %45 = vector.broadcast %cst_18 : f32 to vector<8x128xf32>
      %c0_19 = arith.constant 0 : index
      %c0_20 = arith.constant 0 : index
      %46 = vector.load %arg4[%c0_19, %c0_20] : memref<8x128xf32, #tpu.memory_space<vmem>>, vector<8x128xf32>
      tpu.vector_store %arg4[%c0_19, %c0_20], %45 {strides = array<i32>} : memref<8x128xf32, #tpu.memory_space<vmem>>, vector<8x128xf32>,
    } else {
    }
    %c0 = arith.constant 0 : index
    %c0_1 = arith.constant 0 : index
    %3 = vector.load %arg2[%c0, %c0_1] : memref<16x128xf32, #tpu.memory_space<vmem>>, vector<16x128xf32>
    %c0_2 = arith.constant 0 : index
    %c0_3 = arith.constant 0 : index
    %4 = vector.load %arg3[%c0_2, %c0_3] : memref<16x128xf32, #tpu.memory_space<vmem>>, vector<16x128xf32>
    %5 = math.absf %3 : vector<16x128xf32>
    %cst = arith.constant 0.000000e+00 : f32
    %6 = vector.broadcast %cst : f32 to vector<16x128xf32>
    %7 = arith.subf %6, %5 : vector<16x128xf32>
    %8 = math.exp %7 : vector<16x128xf32>
    %cst_4 = arith.constant 1.000000e+00 : f32
    %9 = vector.broadcast %cst_4 : f32 to vector<16x128xf32>
    %10 = arith.addf %9, %8 : vector<16x128xf32>
    %cst_5 = arith.constant 1.000000e+00 : f32
    %11 = vector.broadcast %cst_5 : f32 to vector<16x128xf32>
    %12 = arith.divf %11, %10 : vector<16x128xf32>
    %cst_6 = arith.constant 0.000000e+00 : f32
    %13 = vector.broadcast %cst_6 : f32 to vector<16x128xf32>
    %14 = arith.cmpf oge, %3, %13 : vector<16x128xf32>
    %15 = arith.mulf %8, %12 : vector<16x128xf32>
    %16 = arith.select %14, %12, %15 : vector<16x128xi1>, vector<16x128xf32>
    %cst_7 = arith.constant 1.000000e+00 : f32
    %17 = vector.broadcast %cst_7 : f32 to vector<16x128xf32>
    %18 = arith.subf %17, %16 : vector<16x128xf32>
    %19 = arith.mulf %18, %4 : vector<16x128xf32>
    %cst_8 = arith.constant 1.000000e+00 : f32
    %20 = vector.broadcast %cst_8 : f32 to vector<16x128xf32>
    %21 = arith.subf %20, %4 : vector<16x128xf32>
    %22 = arith.mulf %16, %21 : vector<16x128xf32>
    %23 = arith.addf %19, %22 : vector<16x128xf32>
    %24 = arith.mulf %23, %23 : vector<16x128xf32>
    %cst_9 = arith.constant 2.500000e-01 : f32
    %25 = vector.broadcast %cst_9 : f32 to vector<16x128xf32>
    %26 = arith.mulf %25, %4 : vector<16x128xf32>
    %cst_10 = arith.constant 1.000000e+00 : f32
    %27 = vector.broadcast %cst_10 : f32 to vector<16x128xf32>
    %28 = arith.subf %27, %4 : vector<16x128xf32>
    %cst_11 = arith.constant 7.500000e-01 : f32
    %29 = vector.broadcast %cst_11 : f32 to vector<16x128xf32>
    %30 = arith.mulf %29, %28 : vector<16x128xf32>
    %31 = arith.addf %26, %30 : vector<16x128xf32>
    %32 = arith.mulf %31, %24 : vector<16x128xf32>
    %cst_12 = arith.constant 0.000000e+00 : f32
    %33 = vector.broadcast %cst_12 : f32 to vector<16x128xf32>
    %34 = arith.maximumf %3, %33 : vector<16x128xf32>
    %35 = arith.mulf %3, %4 : vector<16x128xf32>
    %36 = arith.subf %34, %35 : vector<16x128xf32>
    %37 = math.log1p %8 : vector<16x128xf32>
    %38 = arith.addf %36, %37 : vector<16x128xf32>
    %39 = arith.mulf %38, %32 : vector<16x128xf32>
    %c0_13 = arith.constant 0 : index
    %c0_14 = arith.constant 0 : index
    %40 = vector.load %arg4[%c0_13, %c0_14] : memref<8x128xf32, #tpu.memory_space<vmem>>, vector<8x128xf32>
    %41 = vector.shape_cast %39 : vector<16x128xf32> to vector<2x8x128xf32>
    %cst_15 = arith.constant dense<0.000000e+00> : vector<8x128xf32>
    %42 = vector.multi_reduction <add>, %41, %cst_15 [0] : vector<2x8x128xf32> to vector<8x128xf32>
    %43 = arith.addf %40, %42 : vector<8x128xf32>
    %c0_16 = arith.constant 0 : index
    %c0_17 = arith.constant 0 : index
    %44 = vector.load %arg4[%c0_16, %c0_17] : memref<8x128xf32, #tpu.memory_space<vmem>>, vector<8x128xf32>
    tpu.vector_store %arg4[%c0_16, %c0_17], %43 {strides = array<i32>} : memref<8x128xf32, #tpu.memory_space<vmem>>, vector<8x128xf32>,
    return
  }
  func.func @transform_0(%arg0: i32, %arg1: i32) -> (i32, i32) {
    %c1_i32 = arith.constant 1 : i32
    %0 = arith.muli %arg0, %c1_i32 : i32
    %1 = arith.addi %0, %arg1 : i32
    %c0_i32 = arith.constant 0 : i32
    %c0_i32_0 = arith.constant 0 : i32
    return %1, %c0_i32 : i32, i32
  }
  func.func @transform_1(%arg0: i32, %arg1: i32) -> (i32, i32) {
    %c1_i32 = arith.constant 1 : i32
    %0 = arith.muli %arg0, %c1_i32 : i32
    %1 = arith.addi %0, %arg1 : i32
    %c0_i32 = arith.constant 0 : i32
    %c0_i32_0 = arith.constant 0 : i32
    return %1, %c0_i32 : i32, i32
  }
  func.func @transform_2(%arg0: i32, %arg1: i32) -> (i32, i32) {
    %c0_i32 = arith.constant 0 : i32
    %c0_i32_0 = arith.constant 0 : i32
    return %arg0, %c0_i32 : i32, i32
  }
}

</mosaic_0001>

<llo_original>
// kernel: tpu_custom_call.1
$region0: #{tpu_custom_call.1}
  #allocation0 [shape = 'u32[]', space=smem, size = 0x4, offset = 0x4, fixed_abs, tag = 'smem constant byte address 0x4 - core index']
  #allocation1 [shape = 'u32[144,128]{1,0:T(1,128)}', space=vmem, size = 0x12000, scoped, tag = 'internal scratch']
  %s0 = inlined_call_operand.hbm [shape: f32[16,128], index: 0, kind: input, shape index: {}]
  %s1 = inlined_call_operand.hbm [shape: f32[16,128], index: 1, kind: input, shape index: {}]
  %s2 = inlined_call_operand.hbm [shape: f32[8,128], index: 2, kind: output, shape index: {}]
  %s3 = sld [smem:[#allocation0]]
  $region30: #{tpu_custom_call.1} parent=0
    _
  %s5 = ssub.s32 1, %s3
  %s6 = scalar_select 0, %s5, %s3
  $region1: #{tpu_custom_call.1} parent=0
    #allocation2 [shape = 'u8[8192]{0}', space=vmem, size = 0x2000, scoped, tag = 'input window, operand 0, single buffered']
    #allocation3 [shape = 's32[1]{0}', space=sflag, size = 0x4, scoped, tag = 'scoped memory for tpu_custom_call.1']
    #allocation4 [shape = 's32[1]{0}', space=sflag, size = 0x4, scoped, tag = 'scoped memory for tpu_custom_call.1']
    #allocation5 [shape = 'u8[8192]{0}', space=vmem, size = 0x2000, scoped, tag = 'input window, operand 1, single buffered']
    #allocation6 [shape = 's32[1]{0}', space=sflag, size = 0x4, scoped, tag = 'scoped memory for tpu_custom_call.1']
    #allocation7 [shape = 'u8[4096]{0}', space=vmem, size = 0x1000, scoped, tag = 'output window, operand 0, single buffered']
    %7 = vsyncpa [#allocation3], 0
    %8 = vsyncpa [#allocation6], 0
    %9 = vsyncpa [#allocation4], 0
    // Predicated region
    $region2: #{tpu_custom_call.1} parent=1 // pred_check
      _
    $region3: #{tpu_custom_call.1} parent=1 // pred_check_branch
      %11 = sbr.rel (0) target = $region5
    $region4: #{tpu_custom_call.1} parent=1 // pred_region
      %s12 = sadd.s32 0, 0
      %s13 = smul.u32 2, %s12
      %s15 = ssub.s32 256, 256
      %16 = vsyncadd [#allocation3], %s15
      %s17 = smul.addr %s13, 128
      %s18 = scalar_lea.hbm %s0, %s17
      %s19 = sshll.u32 [#allocation2], 4
      %s20 = int_to_ptr.vmem [resolvable:$true] %s19
      %25 = dma.hbm_to_vmem [thread:$0]  %s18, 256, %s20, [#allocation3], 128, 128, 8
    $region5: #{tpu_custom_call.1} parent=1 // pred_fallthru
      _
    // Predicated region
    $region6: #{tpu_custom_call.1} parent=1 // pred_check
      _
    $region7: #{tpu_custom_call.1} parent=1 // pred_check_branch
      %27 = sbr.rel (0) target = $region9
    $region8: #{tpu_custom_call.1} parent=1 // pred_region
      %s28 = sadd.s32 0, 0
      %s29 = smul.u32 2, %s28
      %s31 = ssub.s32 256, 256
      %32 = vsyncadd [#allocation6], %s31
      %s33 = smul.addr %s29, 128
      %s34 = scalar_lea.hbm %s1, %s33
      %s35 = sshll.u32 [#allocation5], 4
      %s36 = int_to_ptr.vmem [resolvable:$true] %s35
      %41 = dma.hbm_to_vmem [thread:$0]  %s34, 256, %s36, [#allocation6], 128, 128, 8
    $region9: #{tpu_custom_call.1} parent=1 // pred_fallthru
      _
    // Predicated region
    $region10: #{tpu_custom_call.1} parent=1 // pred_check
      _
    $region11: #{tpu_custom_call.1} parent=1 // pred_check_branch
      %43 = sbr.rel (0) target = $region13
    $region12: #{tpu_custom_call.1} parent=1 // pred_region
      %44 = dma.done [#allocation3], 256
    $region13: #{tpu_custom_call.1} parent=1 // pred_fallthru
      _
    // Predicated region
    $region14: #{tpu_custom_call.1} parent=1 // pred_check
      _
    $region15: #{tpu_custom_call.1} parent=1 // pred_check_branch
      %46 = sbr.rel (0) target = $region17
    $region16: #{tpu_custom_call.1} parent=1 // pred_region
      %47 = dma.done [#allocation6], 256
    $region17: #{tpu_custom_call.1} parent=1 // pred_fallthru
      _
    %s48 = sadd.s32 0, 0
    %s49 = smul.u32 2, %s48
    %s50 = sadd.s32 0, 0
    %s51 = smul.u32 2, %s50
    %p52 = scmp.eq.s32.totalorder 0, 0
    // Predicated region
    $region18: #{tpu_custom_call.1} parent=1 // pred_check
      %p53 = pneg %p52
    $region19: #{tpu_custom_call.1} parent=1 // pred_check_branch
      %55 = sbr.rel (%p53) target = $region21
    $region20: #{tpu_custom_call.1} parent=1 // pred_region
      %56 = vst [vmem:[#allocation7] sm:$0xff] 0.0
    $region21: #{tpu_custom_call.1} parent=1 // pred_fallthru
      _
    %v57 = vld [vmem:[#allocation2] sm:$0xff]
    %v58 = vld [vmem:[#allocation2 + $0x8] sm:$0xff]
    %v59 = vld [vmem:[#allocation5] sm:$0xff]
    %v60 = vld [vmem:[#allocation5 + $0x8] sm:$0xff]
    %v61 = vand.u32 2147483647, %v57
    %v62 = vand.u32 2147483647, %v58
    %v63 = vsub.f32 0.0, %v61
    %v64 = vsub.f32 0.0, %v62
    %v65 = vmul.f32 %v63, 1.442695
    %v66 = vpow.pop %v65
    %v67 = vmul.f32 %v64, 1.442695
    %v68 = vpow.pop %v67
    %v69 = vadd.f32 %v66, 1.0
    %v70 = vadd.f32 %v68, 1.0
    %v71 = vrcp.pop %v69
    %v72 = vmul.f32 1.0, %v71
    %v73 = vrcp.pop %v70
    %v74 = vmul.f32 1.0, %v73
    %vm75 = vcmp.ge.f32.partialorder %v57, 0.0
    %vm76 = vcmp.ge.f32.partialorder %v58, 0.0
    %v77 = vmul.f32 %v66, %v72
    %v78 = vmul.f32 %v68, %v74
    %v79 = vsel %vm75, %v72, %v77
    %v80 = vsel %vm76, %v74, %v78
    %v81 = vsub.f32 1.0, %v79
    %v82 = vsub.f32 1.0, %v80
    %v83 = vmul.f32 %v81, %v59
    %v84 = vmul.f32 %v82, %v60
    %v85 = vsub.f32 1.0, %v59
    %v86 = vsub.f32 1.0, %v60
    %v87 = vmul.f32 %v79, %v85
    %v88 = vmul.f32 %v80, %v86
    %v89 = vadd.f32 %v83, %v87
    %v90 = vadd.f32 %v84, %v88
    %v91 = vmul.f32 %v89, %v89
    %v92 = vmul.f32 %v90, %v90
    %v93 = vmul.f32 %v59, 0.25
    %v94 = vmul.f32 %v60, 0.25
    %v95 = vmul.f32 %v85, 0.75
    %v96 = vmul.f32 %v86, 0.75
    %v97 = vadd.f32 %v93, %v95
    %v98 = vadd.f32 %v94, %v96
    %v99 = vmul.f32 %v97, %v91
    %v100 = vmul.f32 %v98, %v92
    %v101 = vmax.f32 %v57, 0.0
    %v102 = vmax.f32 %v58, 0.0
    %v103 = vmul.f32 %v57, %v59
    %v104 = vmul.f32 %v58, %v60
    %v105 = vsub.f32 %v101, %v103
    %v106 = vsub.f32 %v102, %v104
    %v107 = vadd.f32 %v66, 1.0
    %v108 = vlog2.pop %v107
    %v109 = vmul.f32 %v108, 0.6931472
    %v110 = vmul.f32 -0.5, %v66
    %v111 = vadd.f32 %v110, 1.0
    %v112 = vmul.f32 %v111, %v66
    %v113 = vand.u32 2147483647, %v66
    %vm114 = vcmp.lt.f32.partialorder %v113, 0.0004427343
    %v115 = vsel %vm114, %v112, %v109
    %v116 = vadd.f32 %v68, 1.0
    %v117 = vlog2.pop %v116
    %v118 = vmul.f32 %v117, 0.6931472
    %v119 = vmul.f32 -0.5, %v68
    %v120 = vadd.f32 %v119, 1.0
    %v121 = vmul.f32 %v120, %v68
    %v122 = vand.u32 2147483647, %v68
    %vm123 = vcmp.lt.f32.partialorder %v122, 0.0004427343
    %v124 = vsel %vm123, %v121, %v118
    %v125 = vadd.f32 %v105, %v115
    %v126 = vadd.f32 %v106, %v124
    %v127 = vmul.f32 %v125, %v99
    %v128 = vmul.f32 %v126, %v100
    %v129 = vld [vmem:[#allocation7] sm:$0xff]
    %v130 = vadd.f32 %v127, %v128
    %v131 = vadd.f32 %v129, %v130
    %132 = vst [vmem:[#allocation7] sm:$0xff] %v131
    // Predicated region
    $region22: #{tpu_custom_call.1} parent=1 // pred_check
      _
    $region23: #{tpu_custom_call.1} parent=1 // pred_check_branch
      %134 = sbr.rel (0) target = $region25
    $region24: #{tpu_custom_call.1} parent=1 // pred_region
      %s136 = ssub.s32 128, 128
      %137 = vsyncadd [#allocation4], %s136
      %s139 = sshll.u32 [#allocation7], 4
      %s140 = int_to_ptr.vmem [resolvable:$true] %s139
      %142 = dma.vmem_to_hbm [thread:$0]  %s140, 128, %s2, [#allocation4]
    $region25: #{tpu_custom_call.1} parent=1 // pred_fallthru
      _
    // Predicated region
    $region26: #{tpu_custom_call.1} parent=1 // pred_check
      _
    $region27: #{tpu_custom_call.1} parent=1 // pred_check_branch
      %144 = sbr.rel (0) target = $region29
    $region28: #{tpu_custom_call.1} parent=1 // pred_region
      %145 = dma.done [#allocation4], 128
    $region29: #{tpu_custom_call.1} parent=1 // pred_fallthru
      _
    %146 = vsyncpa [#allocation3], 1
    %147 = vsyncpa [#allocation6], 1
    %148 = vsyncpa [#allocation4], 1

</llo_original>
